<compile_context>
chip_gen: v7x
topology: tpu7x:2x2x1
jax: 0.10.0
libtpu: 0.0.40
codegen_flags: <defaults>
</compile_context>

<pallas_src>
import functools
from dataclasses import dataclass

import jax
import jax.numpy as jnp
from jax.experimental import pallas as pl
from jax.experimental.pallas import tpu as pltpu


@dataclass
class Config:
    evaluation: str = "standard"
    gumbel: float = 0.0


# Lanes per grid step. 8 teachers x 2048 lanes x 4 B = 64 KiB per buffer;
# even with 3 inputs + 2 outputs double-buffered this is far below v7x's
# 64 MiB VMEM, while >= 512 lanes keeps us near the HBM roofline.
_TILE_N = 2048

# Shard the lane grid across TensorCores on v7x (harmless on v5e / v6e).
_CPARAMS = pltpu.CompilerParams(dimension_semantics=("parallel",))


# ---------------------------------------------------------------------------
# Kernels
# ---------------------------------------------------------------------------

def _mul_kernel(w_ref, x_ref, loss_ref):
    # aed-loo branch: teacher_loss = W * x  (pure elementwise, VPU)
    loss_ref[...] = w_ref[...] * x_ref[...]


def _softmax_mul_loss_kernel(w_ref, x_ref, loss_ref):
    # train branch: loss = softmax(W, axis=0) * x ; softmaxed weights are NOT
    # materialized (they were discarded by the caller anyway).
    w = w_ref[...].astype(jnp.float32)
    m = jnp.max(w, axis=0, keepdims=True)                 # XLU sublane reduce
    e = jnp.exp(w - m)                                    # EUP
    sm = e / jnp.sum(e, axis=0, keepdims=True)            # exact normalization
    loss_ref[...] = (sm * x_ref[...].astype(jnp.float32)).astype(loss_ref.dtype)


def _softmax_mul_kernel(w_ref, x_ref, loss_ref, tw_ref):
    # eval branch (gumbel == 0): needs both the loss and the softmaxed weights.
    w = w_ref[...].astype(jnp.float32)
    m = jnp.max(w, axis=0, keepdims=True)
    e = jnp.exp(w - m)
    tw = e / jnp.sum(e, axis=0, keepdims=True)
    tw_ref[...] = tw.astype(tw_ref.dtype)
    loss_ref[...] = (tw * x_ref[...].astype(jnp.float32)).astype(loss_ref.dtype)


def _gumbel_softmax_mul_kernel(w_ref, g_ref, x_ref, loss_ref, tw_ref, *, tau):
    # eval branch (gumbel > 0):
    #   gs = gumbel_softmax(W, tau, dim=0)   (soft, hard=False)
    #   teacher_weights = softmax(-gs, dim=0)
    #   teacher_loss = teacher_weights * x
    # Gumbel noise g arrives as a tiled input (drawn in the wrapper).
    w = w_ref[...].astype(jnp.float32)
    g = g_ref[...].astype(jnp.float32)
    logits = (w + g) * (1.0 / tau)
    m1 = jnp.max(logits, axis=0, keepdims=True)
    e1 = jnp.exp(logits - m1)
    gs = e1 / jnp.sum(e1, axis=0, keepdims=True)          # exact normalization

    # gs is in [0, 1]  =>  exp(-gs) is in [1/e, 1]: no max-subtraction needed.
    e2 = jnp.exp(-gs)
    tw = e2 / jnp.sum(e2, axis=0, keepdims=True)          # exact normalization

    tw_ref[...] = tw.astype(tw_ref.dtype)
    loss_ref[...] = (tw * x_ref[...].astype(jnp.float32)).astype(loss_ref.dtype)


# ---------------------------------------------------------------------------
# Wrappers: lane-dense padding + 1-D grid over the lane (N) axis
# ---------------------------------------------------------------------------

def _tiling(n):
    """Return (padded_n, tile): padded_n is a lane-dense multiple of tile."""
    n_dense = ((n + 127) // 128) * 128          # multiple of 128 lanes
    tile = min(_TILE_N, n_dense)
    n_pad = ((n_dense + tile - 1) // tile) * tile
    return n_pad, tile


def _pad_lanes(a, n_pad):
    n = a.shape[1]
    if n == n_pad:
        return a
    return jnp.pad(a, ((0, 0), (0, n_pad - n)))


def _col_spec(t, tile):
    # Whole teacher axis per block (softmax is a per-column reduce), tiled lanes.
    return pl.BlockSpec((t, tile), lambda i: (0, i))


def _aed_loo_forward(W, x):
    T, N = W.shape
    n_pad, tile = _tiling(N)
    spec = _col_spec(T, tile)
    loss = pl.pallas_call(
        _mul_kernel,
        out_shape=jax.ShapeDtypeStruct((T, n_pad), W.dtype),
        grid=(n_pad // tile,),
        in_specs=[spec, spec],
        out_specs=spec,
        compiler_params=_CPARAMS,
    )(_pad_lanes(W, n_pad), _pad_lanes(x, n_pad))
    return loss[:, :N], W


def _train_forward(W, x):
    # stop_gradient is the JAX analogue of the requires_grad=False deep copy.
    w_nograd = jax.lax.stop_gradient(W)
    T, N = W.shape
    n_pad, tile = _tiling(N)
    spec = _col_spec(T, tile)
    loss = pl.pallas_call(
        _softmax_mul_loss_kernel,
        out_shape=jax.ShapeDtypeStruct((T, n_pad), W.dtype),
        grid=(n_pad // tile,),
        in_specs=[spec, spec],
        out_specs=spec,
        compiler_params=_CPARAMS,
    )(_pad_lanes(w_nograd, n_pad), _pad_lanes(x, n_pad))
    # TODO(synk): add a custom_vjp (d loss / d x = softmax(w_nograd)) if this
    # training branch must be differentiated w.r.t. x under jax.grad.
    return loss[:, :N], w_nograd


def _eval_forward(W, x, gumbel_tau, seed):
    x_nograd = jax.lax.stop_gradient(x)
    T, N = W.shape
    n_pad, tile = _tiling(N)
    spec = _col_spec(T, tile)
    grid = (n_pad // tile,)
    out_shapes = (jax.ShapeDtypeStruct((T, n_pad), W.dtype),
                  jax.ShapeDtypeStruct((T, n_pad), W.dtype))
    if gumbel_tau > 0:
        # Gumbel noise drawn host-side (stateless, works on every backend and
        # is independent per lane tile by construction).
        g = jax.random.gumbel(jax.random.PRNGKey(seed), (T, n_pad), jnp.float32)
        kern = functools.partial(_gumbel_softmax_mul_kernel, tau=float(gumbel_tau))
        loss, tw = pl.pallas_call(
            kern,
            out_shape=out_shapes,
            grid=grid,
            in_specs=[spec, spec, spec],
            out_specs=(spec, spec),
            compiler_params=_CPARAMS,
        )(_pad_lanes(W, n_pad), g, _pad_lanes(x_nograd, n_pad))
    else:
        loss, tw = pl.pallas_call(
            _softmax_mul_kernel,
            out_shape=out_shapes,
            grid=grid,
            in_specs=[spec, spec],
            out_specs=(spec, spec),
            compiler_params=_CPARAMS,
        )(_pad_lanes(W, n_pad), _pad_lanes(x_nograd, n_pad))
    return loss[:, :N], tw[:, :N]


class TeacherWeightsPallas:
    """JAX/Pallas equivalent of the PyTorch TeacherWeights module."""

    def __init__(self, config: Config, weights: jnp.ndarray):
        self.W = weights
        self.config = config

    def __call__(self, x, train=True, seed=0):
        if self.config.evaluation == "aed-loo":
            return _aed_loo_forward(self.W, x)
        elif train:
            return _train_forward(self.W, x)
        else:
            return _eval_forward(self.W, x, self.config.gumbel, seed)


# ---------------------------------------------------------------------------
# Demo / correctness check
# ---------------------------------------------------------------------------

if __name__ == "__main__":
    T, N = 8, 200  # teachers x per-sample losses (ragged N exercises padding)
    key = jax.random.PRNGKey(0)
    kw, kx, kw2, kx2 = jax.random.split(key, 4)
    W = jax.random.normal(kw, (T, N), dtype=jnp.float32)
    x = jax.random.normal(kx, (T, N), dtype=jnp.float32)

    TOL = dict(atol=1e-5, rtol=1e-5)  # exact-division softmax: tight tolerance

    # --- train branch (softmax over dim 0, multiply; loss-only kernel) ---
    mod_train = TeacherWeightsPallas(Config(evaluation="standard", gumbel=0.0), W)
    loss_tr, w_tr = mod_train(x, train=True)
    jax.block_until_ready((loss_tr, w_tr))
    ref_tr = jax.nn.softmax(W, axis=0) * x
    assert jnp.allclose(loss_tr, ref_tr, **TOL), "train branch mismatch"
    assert jnp.allclose(w_tr, W), "train branch W mismatch"

    # --- aed-loo branch (plain elementwise multiply) ---
    mod_loo = TeacherWeightsPallas(Config(evaluation="aed-loo", gumbel=0.0), W)
    loss_loo, w_loo = mod_loo(x, train=True)
    jax.block_until_ready((loss_loo, w_loo))
    assert jnp.allclose(loss_loo, W * x, atol=1e-6), "aed-loo branch mismatch"

    # --- eval branch, no gumbel ---
    mod_ev = TeacherWeightsPallas(Config(evaluation="standard", gumbel=0.0), W)
    loss_ev, tw_ev = mod_ev(x, train=False)
    jax.block_until_ready((loss_ev, tw_ev))
    assert jnp.allclose(tw_ev, jax.nn.softmax(W, axis=0), **TOL), "eval tw mismatch"
    assert jnp.allclose(loss_ev, jax.nn.softmax(W, axis=0) * x, **TOL), "eval loss mismatch"

    # --- eval branch, gumbel > 0 (stochastic; check structural properties) ---
    mod_gs = TeacherWeightsPallas(Config(evaluation="standard", gumbel=0.5), W)
    loss_gs, tw_gs = mod_gs(x, train=False, seed=1234)
    jax.block_until_ready((loss_gs, tw_gs))
    col_sums = jnp.sum(tw_gs, axis=0)
    assert jnp.allclose(col_sums, jnp.ones_like(col_sums), atol=2e-3), \
        "gumbel teacher_weights not normalized over dim 0"
    assert bool(jnp.all(jnp.isfinite(loss_gs))), "gumbel loss not finite"
    # exp(-gs) with gs in [0,1] => weights bounded in (1/(1+(T-1)e), e/(e+T-1))
    assert bool(jnp.all(tw_gs > 0.0)) and bool(jnp.all(tw_gs < 1.0)), \
        "gumbel teacher_weights out of range"

    # --- multi-tile grid check (N > TILE_N exercises the lane grid + padding) ---
    N2 = 4300
    W2 = jax.random.normal(kw2, (T, N2), dtype=jnp.float32)
    x2 = jax.random.normal(kx2, (T, N2), dtype=jnp.float32)
    mod_big = TeacherWeightsPallas(Config(evaluation="standard", gumbel=0.0), W2)
    loss_big, w_big = mod_big(x2, train=True)
    jax.block_until_ready((loss_big, w_big))
    assert loss_big.shape == (T, N2)
    assert jnp.allclose(loss_big, jax.nn.softmax(W2, axis=0) * x2, **TOL), \
        "multi-tile train branch mismatch"

    print("KERNEL_OK")
</pallas_src>

<mosaic_0001>
module attributes {stable_mosaic.version = 11 : i64} {
  func.func @_softmax_mul_loss_kernel(%arg0: i32, %arg1: memref<8x256xf32, #tpu.memory_space<vmem>>, %arg2: memref<8x256xf32, #tpu.memory_space<vmem>>, %arg3: memref<8x256xf32, #tpu.memory_space<vmem>>) attributes {dimension_semantics = [#tpu.dimension_semantics<parallel>], iteration_bounds = array<i64: 1>, scalar_prefetch = 0 : i64, scratch_operands = 0 : i64, tpu.core_type = #tpu.core_type<tc>, window_params = [{transform_indices = @transform_0, window_bounds = array<i64: 8, 256>}, {transform_indices = @transform_1, window_bounds = array<i64: 8, 256>}, {transform_indices = @transform_2, window_bounds = array<i64: 8, 256>}]} {
    %c0 = arith.constant 0 : index
    %c0_0 = arith.constant 0 : index
    %0 = vector.load %arg1[%c0, %c0_0] : memref<8x256xf32, #tpu.memory_space<vmem>>, vector<8x256xf32>
    %cst = arith.constant dense<0xFF800000> : vector<256xf32>
    %1 = vector.multi_reduction <maximumf>, %0, %cst [0] : vector<8x256xf32> to vector<256xf32>
    %2 = vector.shape_cast %1 : vector<256xf32> to vector<1x256xf32>
    %3 = vector.broadcast %2 : vector<1x256xf32> to vector<8x256xf32>
    %4 = arith.subf %0, %3 : vector<8x256xf32>
    %5 = math.exp %4 : vector<8x256xf32>
    %cst_1 = arith.constant dense<0.000000e+00> : vector<256xf32>
    %6 = vector.multi_reduction <add>, %5, %cst_1 [0] : vector<8x256xf32> to vector<256xf32>
    %7 = vector.shape_cast %6 : vector<256xf32> to vector<1x256xf32>
    %8 = vector.broadcast %7 : vector<1x256xf32> to vector<8x256xf32>
    %9 = arith.divf %5, %8 : vector<8x256xf32>
    %c0_2 = arith.constant 0 : index
    %c0_3 = arith.constant 0 : index
    %10 = vector.load %arg2[%c0_2, %c0_3] : memref<8x256xf32, #tpu.memory_space<vmem>>, vector<8x256xf32>
    %11 = arith.mulf %9, %10 : vector<8x256xf32>
    %c0_4 = arith.constant 0 : index
    %c0_5 = arith.constant 0 : index
    %12 = vector.load %arg3[%c0_4, %c0_5] : memref<8x256xf32, #tpu.memory_space<vmem>>, vector<8x256xf32>
    tpu.vector_store %arg3[%c0_4, %c0_5], %11 {strides = array<i32>} : memref<8x256xf32, #tpu.memory_space<vmem>>, vector<8x256xf32>,
    return
  }
  func.func @transform_0(%arg0: i32) -> (i32, i32) {
    %c0_i32 = arith.constant 0 : i32
    %c0_i32_0 = arith.constant 0 : i32
    return %c0_i32, %arg0 : i32, i32
  }
  func.func @transform_1(%arg0: i32) -> (i32, i32) {
    %c0_i32 = arith.constant 0 : i32
    %c0_i32_0 = arith.constant 0 : i32
    return %c0_i32, %arg0 : i32, i32
  }
  func.func @transform_2(%arg0: i32) -> (i32, i32) {
    %c0_i32 = arith.constant 0 : i32
    %c0_i32_0 = arith.constant 0 : i32
    return %c0_i32, %arg0 : i32, i32
  }
}

</mosaic_0001>

<llo_original>
// kernel: tpu_custom_call.1
$region0: #{tpu_custom_call.1}
  #allocation0 [shape = 'u32[]', space=smem, size = 0x4, offset = 0x4, fixed_abs, tag = 'smem constant byte address 0x4 - core index']
  #allocation1 [shape = 'u32[144,128]{1,0:T(1,128)}', space=vmem, size = 0x12000, scoped, tag = 'internal scratch']
  %s0 = inlined_call_operand.hbm [shape: f32[8,256], index: 0, kind: input, shape index: {}]
  %s1 = inlined_call_operand.hbm [shape: f32[8,256], index: 1, kind: input, shape index: {}]
  %s2 = inlined_call_operand.hbm [shape: f32[8,256], index: 2, kind: output, shape index: {}]
  %s3 = sld [smem:[#allocation0]]
  $region26: #{tpu_custom_call.1} parent=0
    _
  %s5 = ssub.s32 1, %s3
  %s6 = scalar_select 0, %s5, %s3
  $region1: #{tpu_custom_call.1} parent=0
    #allocation2 [shape = 'u8[8192]{0}', space=vmem, size = 0x2000, scoped, tag = 'input window, operand 0, single buffered']
    #allocation3 [shape = 's32[1]{0}', space=sflag, size = 0x4, scoped, tag = 'scoped memory for tpu_custom_call.1']
    #allocation4 [shape = 's32[1]{0}', space=sflag, size = 0x4, scoped, tag = 'scoped memory for tpu_custom_call.1']
    #allocation5 [shape = 'u8[8192]{0}', space=vmem, size = 0x2000, scoped, tag = 'input window, operand 1, single buffered']
    #allocation6 [shape = 's32[1]{0}', space=sflag, size = 0x4, scoped, tag = 'scoped memory for tpu_custom_call.1']
    #allocation7 [shape = 'u8[8192]{0}', space=vmem, size = 0x2000, scoped, tag = 'output window, operand 0, single buffered']
    %7 = vsyncpa [#allocation3], 0
    %8 = vsyncpa [#allocation6], 0
    %9 = vsyncpa [#allocation4], 0
    // Predicated region
    $region2: #{tpu_custom_call.1} parent=1 // pred_check
      _
    $region3: #{tpu_custom_call.1} parent=1 // pred_check_branch
      %11 = sbr.rel (0) target = $region5
    $region4: #{tpu_custom_call.1} parent=1 // pred_region
      %s13 = ssub.s32 256, 256
      %14 = vsyncadd [#allocation3], %s13
      %s16 = sshll.u32 [#allocation2], 4
      %s17 = int_to_ptr.vmem [resolvable:$true] %s16
      %19 = dma.hbm_to_vmem [thread:$0]  %s0, 256, %s17, [#allocation3]
    $region5: #{tpu_custom_call.1} parent=1 // pred_fallthru
      _
    // Predicated region
    $region6: #{tpu_custom_call.1} parent=1 // pred_check
      _
    $region7: #{tpu_custom_call.1} parent=1 // pred_check_branch
      %21 = sbr.rel (0) target = $region9
    $region8: #{tpu_custom_call.1} parent=1 // pred_region
      %s23 = ssub.s32 256, 256
      %24 = vsyncadd [#allocation6], %s23
      %s26 = sshll.u32 [#allocation5], 4
      %s27 = int_to_ptr.vmem [resolvable:$true] %s26
      %29 = dma.hbm_to_vmem [thread:$0]  %s1, 256, %s27, [#allocation6]
    $region9: #{tpu_custom_call.1} parent=1 // pred_fallthru
      _
    // Predicated region
    $region10: #{tpu_custom_call.1} parent=1 // pred_check
      _
    $region11: #{tpu_custom_call.1} parent=1 // pred_check_branch
      %31 = sbr.rel (0) target = $region13
    $region12: #{tpu_custom_call.1} parent=1 // pred_region
      %32 = dma.done [#allocation3], 256
    $region13: #{tpu_custom_call.1} parent=1 // pred_fallthru
      _
    // Predicated region
    $region14: #{tpu_custom_call.1} parent=1 // pred_check
      _
    $region15: #{tpu_custom_call.1} parent=1 // pred_check_branch
      %34 = sbr.rel (0) target = $region17
    $region16: #{tpu_custom_call.1} parent=1 // pred_region
      %35 = dma.done [#allocation6], 256
    $region17: #{tpu_custom_call.1} parent=1 // pred_fallthru
      _
    %v36 = vld [vmem:[#allocation2] sm:$0xff]
    %v37 = vld [vmem:[#allocation2 + $0x8] sm:$0xff]
    %v38 = vrot.slane %v36, 4
    %v39 = vmax.f32 %v36, %v38
    %v40 = vrot.slane %v39, 2
    %v41 = vmax.f32 %v39, %v40
    %v42 = vrot.slane %v41, 1
    %v43 = vmax.f32 %v41, %v42
    %v44 = vrot.slane %v37, 4
    %v45 = vmax.f32 %v37, %v44
    %v46 = vrot.slane %v45, 2
    %v47 = vmax.f32 %v45, %v46
    %v48 = vrot.slane %v47, 1
    %v49 = vmax.f32 %v47, %v48
    %v50 = vsub.f32 %v36, %v43
    %v51 = vsub.f32 %v37, %v49
    %v52 = vmul.f32 %v50, 1.442695
    %v53 = vpow.pop %v52
    %v54 = vmul.f32 %v51, 1.442695
    %v55 = vpow.pop %v54
    %v56 = vrot.slane %v53, 4
    %v57 = vadd.f32 %v53, %v56
    %v58 = vrot.slane %v57, 2
    %v59 = vadd.f32 %v57, %v58
    %v60 = vrot.slane %v59, 1
    %v61 = vadd.f32 %v59, %v60
    %v62 = vrot.slane %v55, 4
    %v63 = vadd.f32 %v55, %v62
    %v64 = vrot.slane %v63, 2
    %v65 = vadd.f32 %v63, %v64
    %v66 = vrot.slane %v65, 1
    %v67 = vadd.f32 %v65, %v66
    %v68 = vrcp.pop %v61
    %v69 = vmul.f32 %v53, %v68
    %v70 = vrcp.pop %v67
    %v71 = vmul.f32 %v55, %v70
    %v72 = vld [vmem:[#allocation5] sm:$0xff]
    %v73 = vld [vmem:[#allocation5 + $0x8] sm:$0xff]
    %v74 = vmul.f32 %v69, %v72
    %v75 = vmul.f32 %v71, %v73
    %76 = vst [vmem:[#allocation7] sm:$0xff] %v74
    %77 = vst [vmem:[#allocation7 + $0x8] sm:$0xff] %v75
    // Predicated region
    $region18: #{tpu_custom_call.1} parent=1 // pred_check
      _
    $region19: #{tpu_custom_call.1} parent=1 // pred_check_branch
      %79 = sbr.rel (0) target = $region21
    $region20: #{tpu_custom_call.1} parent=1 // pred_region
      %s81 = ssub.s32 256, 256
      %82 = vsyncadd [#allocation4], %s81
      %s84 = sshll.u32 [#allocation7], 4
      %s85 = int_to_ptr.vmem [resolvable:$true] %s84
      %87 = dma.vmem_to_hbm [thread:$0]  %s85, 256, %s2, [#allocation4]
    $region21: #{tpu_custom_call.1} parent=1 // pred_fallthru
      _
    // Predicated region
    $region22: #{tpu_custom_call.1} parent=1 // pred_check
      _
    $region23: #{tpu_custom_call.1} parent=1 // pred_check_branch
      %89 = sbr.rel (0) target = $region25
    $region24: #{tpu_custom_call.1} parent=1 // pred_region
      %90 = dma.done [#allocation4], 256
    $region25: #{tpu_custom_call.1} parent=1 // pred_fallthru
      _
    %91 = vsyncpa [#allocation3], 1
    %92 = vsyncpa [#allocation6], 1
    %93 = vsyncpa [#allocation4], 1

</llo_original>
